<compile_context>
chip_gen: v6e
topology: v6e:2x2x1
jax: 0.10.0
libtpu: 0.0.40
codegen_flags: <defaults>
</compile_context>

<pallas_src>
import functools

import numpy as np
import jax
import jax.numpy as jnp
from jax.experimental import pallas as pl
from jax.experimental.pallas import tpu as pltpu

N_EMBED = 128
BN_EPS = 1e-5


def _round_up(x, m):
    return ((x + m - 1) // m) * m


# --------------------------------------------------------------------------
# Pass 0: fused embed + fc per node tile; emits bf16 h and per-tile BN stats.
# --------------------------------------------------------------------------
def _embed_kernel(n_nodes, tile,
                  node_ref, w_e_ref, b_e_ref, ub_ref, w_f_ref, b_f_ref,
                  h_ref, sum_ref, sq_ref):
    f32 = jnp.float32
    t = pl.program_id(0)

    # [a1 | a2 | x_rdf | x_bdf] = clip(node @ blockdiag(Wa,Wa,Wr,Wb) + b, 0, ub)
    emb = (jnp.dot(node_ref[...], w_e_ref[...], preferred_element_type=f32)
           + b_e_ref[...])                                       # (tile, 512) f32
    emb = jnp.minimum(jnp.maximum(emb, 0.0), ub_ref[...])        # ReLU / ReLU6

    # [fc_rdf(h1) | fc_bdf(h2)] pre-BN via one fused (512, 256) bf16 matmul.
    h = (jnp.dot(emb.astype(jnp.bfloat16), w_f_ref[...],
                 preferred_element_type=f32)
         + b_f_ref[...])                                         # (tile, 256) f32

    h_ref[...] = h.astype(jnp.bfloat16)                          # spill to HBM

    # BatchNorm batch statistics (training mode), padded rows masked out.
    row = jax.lax.broadcasted_iota(jnp.int32, (tile, 1), 0) + t * tile
    hm = h * (row < n_nodes).astype(f32)
    sum_ref[...] = jnp.broadcast_to(jnp.sum(hm, axis=0, keepdims=True),
                                    sum_ref.shape)
    sq_ref[...] = jnp.broadcast_to(jnp.sum(hm * hm, axis=0, keepdims=True),
                                   sq_ref.shape)


# --------------------------------------------------------------------------
# Pass 1: BN apply + ReLU, global_mean_pool via in-kernel one-hot, fc1/fc2 head.
# --------------------------------------------------------------------------
def _pool_head_kernel(g_pad,
                      h_ref, gidx_ref, scale_ref, shift_ref, reff_ref,
                      w1p_ref, w1r_ref, b1_ref, w2t_ref, b2_ref,
                      out_ref, pool_sc, cnt_sc):
    f32 = jnp.float32
    t = pl.program_id(0)
    nt = pl.num_programs(0)

    @pl.when(t == 0)
    def _init():
        pool_sc[...] = jnp.zeros_like(pool_sc)
        cnt_sc[...] = jnp.zeros_like(cnt_sc)

    h_bn = jnp.maximum(h_ref[...].astype(f32) * scale_ref[...] + shift_ref[...],
                       0.0)                                      # (tile, 256)

    gidx = gidx_ref[...]                                         # (1, tile) int32
    g_iota = jax.lax.broadcasted_iota(jnp.int32, (g_pad, gidx.shape[1]), 0)
    onehot = (g_iota == gidx).astype(f32)                        # padded rows: 0
    pool_sc[...] += jnp.dot(onehot.astype(jnp.bfloat16),
                            h_bn.astype(jnp.bfloat16),
                            preferred_element_type=f32)
    cnt_sc[...] += jnp.sum(onehot, axis=1, keepdims=True)

    @pl.when(t == nt - 1)
    def _head():
        # global_mean_pool; empty (padded) graphs divide by 1 and give 0.
        inv_cnt = 1.0 / jnp.maximum(cnt_sc[...], 1.0)            # (g_pad, 1)
        pooled = pool_sc[...] * inv_cnt                          # (g_pad, 256)
        # fc1 on cat([pooled, ref_feat]) via split weights, then ReLU.
        h16 = jnp.maximum(
            jnp.dot(pooled, w1p_ref[...], preferred_element_type=f32)
            + reff_ref[...] * w1r_ref[...] + b1_ref[...], 0.0)   # (g_pad, 16)
        # fc2 (16 -> 1) as a lane reduction, then ReLU.
        gap = jnp.maximum(
            jnp.sum(h16 * w2t_ref[...], axis=1, keepdims=True)
            + b2_ref[...], 0.0)                                  # (g_pad, 1)
        out_ref[...] = jnp.broadcast_to(gap, out_ref.shape)      # lane-dense


def distnn_forward(params, atom_feat, rdf_feat, bdf_feat, graph_idx, ref_feat,
                   num_graphs, *, tile=2048):
    (wa, ba, wr, br, wb, bb, wfr, bfr, wfb, bfb,
     gamma, beta, w1, b1, w2, b2) = params

    n_nodes = atom_feat.shape[0]
    n_af = atom_feat.shape[1] // 2
    n_rf = rdf_feat.shape[1]
    n_bf = bdf_feat.shape[1]
    n_e = N_EMBED
    f32, bf16 = jnp.float32, jnp.bfloat16

    # Node-tile sizing: full array if small; 128-lane-aligned tiles otherwise.
    tile = max(16, min(int(tile), _round_up(n_nodes, 16)))
    if _round_up(n_nodes, tile) > tile:          # multi-tile -> keep lanes aligned
        tile = _round_up(tile, 128)
    n_pad = _round_up(n_nodes, tile)
    n_tiles = n_pad // tile
    g_pad = _round_up(max(num_graphs, 1), 8)

    # ---- fused weights (host/XLA glue, folded outside the kernels) ----
    n_feat = 2 * n_af + n_rf + n_bf
    w_e = jnp.zeros((n_feat, 4 * n_e), f32)
    w_e = w_e.at[:n_af, :n_e].set(wa)
    w_e = w_e.at[n_af:2 * n_af, n_e:2 * n_e].set(wa)
    w_e = w_e.at[2 * n_af:2 * n_af + n_rf, 2 * n_e:3 * n_e].set(wr)
    w_e = w_e.at[2 * n_af + n_rf:, 3 * n_e:].set(wb)
    w_e = w_e.astype(bf16)                                       # (n_feat, 512)
    b_e = jnp.concatenate([ba, ba, br, bb], axis=1)              # (1, 512) f32
    ub = jnp.concatenate([jnp.full((1, 2 * n_e), jnp.inf, f32),  # ReLU lanes
                          jnp.full((1, 2 * n_e), 6.0, f32)],     # ReLU6 lanes
                         axis=1)

    # fc_rdf | fc_bdf fused into one (512, 256) weight over [a1|a2|xr|xb].
    z = jnp.zeros((n_e, n_e), f32)
    w_f = jnp.concatenate([
        jnp.concatenate([wfr[:2 * n_e], wfb[:2 * n_e]], axis=1),   # a1,a2 rows
        jnp.concatenate([wfr[2 * n_e:], z], axis=1),               # xr rows
        jnp.concatenate([z, wfb[2 * n_e:]], axis=1),               # xb rows
    ], axis=0).astype(bf16)
    b_f = jnp.concatenate([bfr, bfb], axis=1)                      # (1, 256) f32

    w1p = w1[:2 * n_e]        # (256, 16): pooled part of fc1
    w1r = w1[2 * n_e:]        # (1, 16):   ref_feat part of fc1
    w2t = w2.T                # (1, 16)

    # ---- padded / cast inputs ----
    node_p = jnp.pad(
        jnp.concatenate([atom_feat, rdf_feat, bdf_feat], axis=1).astype(bf16),
        ((0, n_pad - n_nodes), (0, 0)))                          # (n_pad, n_feat)
    gidx_p = jnp.pad(graph_idx.astype(jnp.int32), (0, n_pad - n_nodes),
                     constant_values=-1).reshape(1, n_pad)
    ref_p = jnp.pad(ref_feat.astype(f32), ((0, g_pad - num_graphs), (0, 0)))

    def const_spec(x):
        # Constant block index -> VMEM-resident across all grid steps.
        return pl.BlockSpec(x.shape, lambda t_: (0, 0))

    # ---------------- pass 0: embed/fc + BN partial stats ----------------
    pass0_consts = [w_e, b_e, ub, w_f, b_f]
    h_bf16, sum_part, sq_part = pl.pallas_call(
        functools.partial(_embed_kernel, n_nodes, tile),
        out_shape=(jax.ShapeDtypeStruct((n_pad, 2 * n_e), bf16),
                   jax.ShapeDtypeStruct((8 * n_tiles, 2 * n_e), f32),
                   jax.ShapeDtypeStruct((8 * n_tiles, 2 * n_e), f32)),
        grid_spec=pltpu.PrefetchScalarGridSpec(
            num_scalar_prefetch=0,
            grid=(n_tiles,),
            in_specs=[pl.BlockSpec((tile, n_feat), lambda t_: (t_, 0))]
                     + [const_spec(x) for x in pass0_consts],
            out_specs=[pl.BlockSpec((tile, 2 * n_e), lambda t_: (t_, 0)),
                       pl.BlockSpec((8, 2 * n_e), lambda t_: (t_, 0)),
                       pl.BlockSpec((8, 2 * n_e), lambda t_: (t_, 0))]),
        compiler_params=pltpu.CompilerParams(
            dimension_semantics=("parallel",),
            vmem_limit_bytes=48 * 1024 * 1024),
    )(node_p, *pass0_consts)

    # BN scale/shift fold (256 elements, tiny XLA work between the two calls).
    sum_t = jnp.sum(sum_part.reshape(n_tiles, 8, 2 * n_e)[:, 0, :],
                    axis=0, keepdims=True)
    sq_t = jnp.sum(sq_part.reshape(n_tiles, 8, 2 * n_e)[:, 0, :],
                   axis=0, keepdims=True)
    mu = sum_t / n_nodes
    var = jnp.maximum(sq_t / n_nodes - mu * mu, 0.0)             # biased var
    scale = gamma * jax.lax.rsqrt(var + BN_EPS)
    shift = beta - mu * scale

    # ---------------- pass 1: BN + ReLU + pool + head ----------------
    pass1_consts = [scale, shift, ref_p, w1p, w1r, b1, w2t, b2]
    out = pl.pallas_call(
        functools.partial(_pool_head_kernel, g_pad),
        out_shape=jax.ShapeDtypeStruct((g_pad, 128), f32),
        grid_spec=pltpu.PrefetchScalarGridSpec(
            num_scalar_prefetch=0,
            grid=(n_tiles,),
            in_specs=[pl.BlockSpec((tile, 2 * n_e), lambda t_: (t_, 0)),
                      pl.BlockSpec((1, tile), lambda t_: (0, t_))]
                     + [const_spec(x) for x in pass1_consts],
            out_specs=pl.BlockSpec((g_pad, 128), lambda t_: (0, 0)),
            scratch_shapes=[
                pltpu.VMEM((g_pad, 2 * n_e), f32),   # pooled segment sums
                pltpu.VMEM((g_pad, 1), f32),         # per-graph node counts
            ]),
        compiler_params=pltpu.CompilerParams(
            dimension_semantics=("arbitrary",),
            vmem_limit_bytes=48 * 1024 * 1024),
    )(h_bf16, gidx_p, *pass1_consts)

    return out[:num_graphs, :1]


def distnn_reference(params, atom_feat, rdf_feat, bdf_feat, graph_idx, ref_feat,
                     num_graphs):
    """Pure-JAX f32 reference mirroring the PyTorch forward (training-mode BN)."""
    (wa, ba, wr, br, wb, bb, wfr, bfr, wfb, bfb,
     gamma, beta, w1, b1, w2, b2) = params
    n_af = atom_feat.shape[1] // 2
    a1 = jnp.maximum(atom_feat[:, :n_af] @ wa + ba, 0.0)
    a2 = jnp.maximum(atom_feat[:, n_af:] @ wa + ba, 0.0)
    xr = jnp.clip(rdf_feat @ wr + br, 0.0, 6.0)
    xb = jnp.clip(bdf_feat @ wb + bb, 0.0, 6.0)
    h1 = jnp.concatenate([a1, a2, xr], axis=1)
    h2 = jnp.concatenate([a1, a2, xb], axis=1)
    h = jnp.concatenate([h1 @ wfr + bfr, h2 @ wfb + bfb], axis=1)
    mu = jnp.mean(h, axis=0, keepdims=True)
    var = jnp.mean((h - mu) ** 2, axis=0, keepdims=True)
    h = jnp.maximum((h - mu) * jax.lax.rsqrt(var + BN_EPS) * gamma + beta, 0.0)
    onehot = (graph_idx[None, :] ==
              jnp.arange(num_graphs)[:, None]).astype(jnp.float32)
    cnt = jnp.maximum(jnp.sum(onehot, axis=1, keepdims=True), 1.0)
    pooled = (onehot @ h) / cnt
    h16 = jnp.maximum(jnp.concatenate([pooled, ref_feat], axis=1) @ w1 + b1, 0.0)
    return jnp.maximum(h16 @ w2 + b2, 0.0)


def init_params(key, n_af, n_rf, n_bf):
    n_e = N_EMBED
    keys = jax.random.split(key, 7)

    def linear(k, fin, fout):
        # nn.Linear default init: U(-1/sqrt(fan_in), 1/sqrt(fan_in)).
        k1, k2 = jax.random.split(k)
        bound = 1.0 / np.sqrt(fin)
        w = jax.random.uniform(k1, (fin, fout), jnp.float32, -bound, bound)
        b = jax.random.uniform(k2, (1, fout), jnp.float32, -bound, bound)
        return w, b

    wa, ba = linear(keys[0], n_af, n_e)          # embed_atom
    wr, br = linear(keys[1], n_rf, n_e)          # embed_rdf
    wb, bb = linear(keys[2], n_bf, n_e)          # embed_bdf
    wfr, bfr = linear(keys[3], 3 * n_e, n_e)     # fc_rdf (384 -> 128)
    wfb, bfb = linear(keys[4], 3 * n_e, n_e)     # fc_bdf (384 -> 128)
    w1, b1 = linear(keys[5], 2 * n_e + 1, 16)    # fc1 (257 -> 16)
    w2, b2 = linear(keys[6], 16, 1)              # fc2 (16 -> 1)

    gamma = jnp.ones((1, 2 * n_e), jnp.float32)  # BatchNorm1d(256) defaults
    beta = jnp.zeros((1, 2 * n_e), jnp.float32)

    return (wa, ba, wr, br, wb, bb, wfr, bfr, wfb, bfb,
            gamma, beta, w1, b1, w2, b2)


if __name__ == "__main__":
    n_af, n_rf, n_bf = 8, 8, 8
    n_nodes, n_graphs = 16, 2

    key = jax.random.PRNGKey(0)
    k_param, k_atom, k_rdf, k_bdf, k_ref = jax.random.split(key, 5)

    params = init_params(k_param, n_af, n_rf, n_bf)
    atom_feat = jax.random.normal(k_atom, (n_nodes, 2 * n_af), jnp.float32)
    rdf_feat = jax.random.normal(k_rdf, (n_nodes, n_rf), jnp.float32)
    bdf_feat = jax.random.normal(k_bdf, (n_nodes, n_bf), jnp.float32)
    graph_idx = jnp.array([0] * 8 + [1] * 8, jnp.int32)
    ref_feat = jax.random.normal(k_ref, (n_graphs, 1), jnp.float32)

    gap = distnn_forward(params, atom_feat, rdf_feat, bdf_feat, graph_idx,
                         ref_feat, n_graphs)
    gap = jax.block_until_ready(gap)
    assert gap.shape == (n_graphs, 1) and gap.dtype == jnp.float32

    ref = jax.block_until_ready(
        distnn_reference(params, atom_feat, rdf_feat, bdf_feat, graph_idx,
                         ref_feat, n_graphs))
    diff = float(jnp.max(jnp.abs(gap - ref)))
    scale = float(jnp.max(jnp.abs(ref)))
    assert diff <= 0.03 + 0.03 * scale, (
        f"kernel/reference mismatch: max|diff|={diff:.5f} vs max|ref|={scale:.5f}")
    print("KERNEL_OK")
</pallas_src>

<mosaic_0001>
module attributes {stable_mosaic.version = 11 : i64} {
  func.func @_embed_kernel(%arg0: i32, %arg1: memref<16x32xbf16, #tpu.memory_space<vmem>>, %arg2: memref<32x512xbf16, #tpu.memory_space<vmem>>, %arg3: memref<1x512xf32, #tpu.memory_space<vmem>>, %arg4: memref<1x512xf32, #tpu.memory_space<vmem>>, %arg5: memref<512x256xbf16, #tpu.memory_space<vmem>>, %arg6: memref<1x256xf32, #tpu.memory_space<vmem>>, %arg7: memref<16x256xbf16, #tpu.memory_space<vmem>>, %arg8: memref<8x256xf32, #tpu.memory_space<vmem>>, %arg9: memref<8x256xf32, #tpu.memory_space<vmem>>) attributes {dimension_semantics = [#tpu.dimension_semantics<parallel>], iteration_bounds = array<i64: 1>, scalar_prefetch = 0 : i64, scratch_operands = 0 : i64, tpu.core_type = #tpu.core_type<tc>, window_params = [{transform_indices = @transform_0, window_bounds = array<i64: 16, 32>}, {pipeline_mode = #tpu.pipeline_mode<synchronous>, transform_indices = @transform_1, window_bounds = array<i64: 32, 512>}, {pipeline_mode = #tpu.pipeline_mode<synchronous>, transform_indices = @transform_2, window_bounds = array<i64: 1, 512>}, {pipeline_mode = #tpu.pipeline_mode<synchronous>, transform_indices = @transform_3, window_bounds = array<i64: 1, 512>}, {pipeline_mode = #tpu.pipeline_mode<synchronous>, transform_indices = @transform_4, window_bounds = array<i64: 512, 256>}, {pipeline_mode = #tpu.pipeline_mode<synchronous>, transform_indices = @transform_5, window_bounds = array<i64: 1, 256>}, {transform_indices = @transform_6, window_bounds = array<i64: 16, 256>}, {transform_indices = @transform_7, window_bounds = array<i64: 8, 256>}, {transform_indices = @transform_8, window_bounds = array<i64: 8, 256>}]} {
    %c0 = arith.constant 0 : index
    %c0_0 = arith.constant 0 : index
    %0 = vector.load %arg1[%c0, %c0_0] : memref<16x32xbf16, #tpu.memory_space<vmem>>, vector<16x32xbf16>
    %c0_1 = arith.constant 0 : index
    %c0_2 = arith.constant 0 : index
    %1 = vector.load %arg2[%c0_1, %c0_2] : memref<32x512xbf16, #tpu.memory_space<vmem>>, vector<32x512xbf16>
    %cst = arith.constant dense<0.000000e+00> : vector<16x512xf32>
    %2 = tpu.matmul %0, %1, %cst {dimension_numbers = #tpu.dot_dimension_numbers<[1], [0], [0], [1], [0, 0, 1, 1], [], []>} : vector<16x32xbf16>, vector<32x512xbf16>, vector<16x512xf32> -> vector<16x512xf32>
    %c0_3 = arith.constant 0 : index
    %c0_4 = arith.constant 0 : index
    %3 = vector.load %arg3[%c0_3, %c0_4] : memref<1x512xf32, #tpu.memory_space<vmem>>, vector<1x512xf32>
    %4 = vector.broadcast %3 : vector<1x512xf32> to vector<16x512xf32>
    %5 = arith.addf %2, %4 : vector<16x512xf32>
    %cst_5 = arith.constant 0.000000e+00 : f32
    %6 = vector.broadcast %cst_5 : f32 to vector<16x512xf32>
    %7 = arith.maximumf %5, %6 : vector<16x512xf32>
    %c0_6 = arith.constant 0 : index
    %c0_7 = arith.constant 0 : index
    %8 = vector.load %arg4[%c0_6, %c0_7] : memref<1x512xf32, #tpu.memory_space<vmem>>, vector<1x512xf32>
    %9 = vector.broadcast %8 : vector<1x512xf32> to vector<16x512xf32>
    %10 = arith.minimumf %7, %9 : vector<16x512xf32>
    %11 = arith.truncf %10 : vector<16x512xf32> to vector<16x512xbf16>
    %c0_8 = arith.constant 0 : index
    %c0_9 = arith.constant 0 : index
    %12 = vector.load %arg5[%c0_8, %c0_9] : memref<512x256xbf16, #tpu.memory_space<vmem>>, vector<512x256xbf16>
    %cst_10 = arith.constant dense<0.000000e+00> : vector<16x256xf32>
    %13 = tpu.matmul %11, %12, %cst_10 {dimension_numbers = #tpu.dot_dimension_numbers<[1], [0], [0], [1], [0, 0, 1, 1], [], []>} : vector<16x512xbf16>, vector<512x256xbf16>, vector<16x256xf32> -> vector<16x256xf32>
    %c0_11 = arith.constant 0 : index
    %c0_12 = arith.constant 0 : index
    %14 = vector.load %arg6[%c0_11, %c0_12] : memref<1x256xf32, #tpu.memory_space<vmem>>, vector<1x256xf32>
    %15 = vector.broadcast %14 : vector<1x256xf32> to vector<16x256xf32>
    %16 = arith.addf %13, %15 : vector<16x256xf32>
    %17 = arith.truncf %16 : vector<16x256xf32> to vector<16x256xbf16>
    %c0_13 = arith.constant 0 : index
    %c0_14 = arith.constant 0 : index
    %18 = vector.load %arg7[%c0_13, %c0_14] : memref<16x256xbf16, #tpu.memory_space<vmem>>, vector<16x256xbf16>
    tpu.vector_store %arg7[%c0_13, %c0_14], %17 {strides = array<i32>} : memref<16x256xbf16, #tpu.memory_space<vmem>>, vector<16x256xbf16>,
    %19 = tpu.iota {dimensions = array<i32: 0>} : vector<16x1xi32>
    %c16_i32 = arith.constant 16 : i32
    %20 = arith.muli %arg0, %c16_i32 : i32
    %21 = vector.broadcast %20 : i32 to vector<16x1xi32>
    %22 = arith.addi %19, %21 : vector<16x1xi32>
    %c16_i32_15 = arith.constant 16 : i32
    %23 = vector.broadcast %c16_i32_15 : i32 to vector<16x1xi32>
    %24 = arith.cmpi slt, %22, %23 : vector<16x1xi32>
    %25 = arith.extui %24 : vector<16x1xi1> to vector<16x1xi32>
    %26 = arith.sitofp %25 : vector<16x1xi32> to vector<16x1xf32>
    %27 = vector.broadcast %26 : vector<16x1xf32> to vector<16x256xf32>
    %28 = arith.mulf %16, %27 : vector<16x256xf32>
    %cst_16 = arith.constant dense<0.000000e+00> : vector<256xf32>
    %29 = vector.multi_reduction <add>, %28, %cst_16 [0] : vector<16x256xf32> to vector<256xf32>
    %30 = vector.shape_cast %29 : vector<256xf32> to vector<1x256xf32>
    %31 = vector.shape_cast %30 : vector<1x256xf32> to vector<1x256xf32>
    %32 = vector.broadcast %31 : vector<1x256xf32> to vector<8x256xf32>
    %c0_17 = arith.constant 0 : index
    %c0_18 = arith.constant 0 : index
    %33 = vector.load %arg8[%c0_17, %c0_18] : memref<8x256xf32, #tpu.memory_space<vmem>>, vector<8x256xf32>
    tpu.vector_store %arg8[%c0_17, %c0_18], %32 {strides = array<i32>} : memref<8x256xf32, #tpu.memory_space<vmem>>, vector<8x256xf32>,
    %34 = arith.mulf %28, %28 : vector<16x256xf32>
    %cst_19 = arith.constant dense<0.000000e+00> : vector<256xf32>
    %35 = vector.multi_reduction <add>, %34, %cst_19 [0] : vector<16x256xf32> to vector<256xf32>
    %36 = vector.shape_cast %35 : vector<256xf32> to vector<1x256xf32>
    %37 = vector.shape_cast %36 : vector<1x256xf32> to vector<1x256xf32>
    %38 = vector.broadcast %37 : vector<1x256xf32> to vector<8x256xf32>
    %c0_20 = arith.constant 0 : index
    %c0_21 = arith.constant 0 : index
    %39 = vector.load %arg9[%c0_20, %c0_21] : memref<8x256xf32, #tpu.memory_space<vmem>>, vector<8x256xf32>
    tpu.vector_store %arg9[%c0_20, %c0_21], %38 {strides = array<i32>} : memref<8x256xf32, #tpu.memory_space<vmem>>, vector<8x256xf32>,
    return
  }
  func.func @transform_0(%arg0: i32) -> (i32, i32) {
    %c0_i32 = arith.constant 0 : i32
    %c0_i32_0 = arith.constant 0 : i32
    return %arg0, %c0_i32 : i32, i32
  }
  func.func @transform_1(%arg0: i32) -> (i32, i32) {
    %c0_i32 = arith.constant 0 : i32
    %c0_i32_0 = arith.constant 0 : i32
    %c0_i32_1 = arith.constant 0 : i32
    return %c0_i32, %c0_i32_0 : i32, i32
  }
  func.func @transform_2(%arg0: i32) -> (i32, i32) {
    %c0_i32 = arith.constant 0 : i32
    %c0_i32_0 = arith.constant 0 : i32
    %c0_i32_1 = arith.constant 0 : i32
    return %c0_i32, %c0_i32_0 : i32, i32
  }
  func.func @transform_3(%arg0: i32) -> (i32, i32) {
    %c0_i32 = arith.constant 0 : i32
    %c0_i32_0 = arith.constant 0 : i32
    %c0_i32_1 = arith.constant 0 : i32
    return %c0_i32, %c0_i32_0 : i32, i32
  }
  func.func @transform_4(%arg0: i32) -> (i32, i32) {
    %c0_i32 = arith.constant 0 : i32
    %c0_i32_0 = arith.constant 0 : i32
    %c0_i32_1 = arith.constant 0 : i32
    return %c0_i32, %c0_i32_0 : i32, i32
  }
  func.func @transform_5(%arg0: i32) -> (i32, i32) {
    %c0_i32 = arith.constant 0 : i32
    %c0_i32_0 = arith.constant 0 : i32
    %c0_i32_1 = arith.constant 0 : i32
    return %c0_i32, %c0_i32_0 : i32, i32
  }
  func.func @transform_6(%arg0: i32) -> (i32, i32) {
    %c0_i32 = arith.constant 0 : i32
    %c0_i32_0 = arith.constant 0 : i32
    return %arg0, %c0_i32 : i32, i32
  }
  func.func @transform_7(%arg0: i32) -> (i32, i32) {
    %c0_i32 = arith.constant 0 : i32
    %c0_i32_0 = arith.constant 0 : i32
    return %arg0, %c0_i32 : i32, i32
  }
  func.func @transform_8(%arg0: i32) -> (i32, i32) {
    %c0_i32 = arith.constant 0 : i32
    %c0_i32_0 = arith.constant 0 : i32
    return %arg0, %c0_i32 : i32, i32
  }
}

</mosaic_0001>

<llo_original>
// kernel: tpu_custom_call.1
$region0: #{tpu_custom_call.1}
  #allocation0 [shape = 'u32[]', space=smem, size = 0x4, offset = 0x4, fixed_abs, tag = 'smem constant byte address 0x4 - core index']
  #allocation1 [shape = 'u32[144,128]{1,0:T(1,128)}', space=vmem, size = 0x12000, scoped, tag = 'internal scratch']
  %s0 = inlined_call_operand.hbm [shape: bf16[16,32], index: 0, kind: input, shape index: {}]
  %s1 = inlined_call_operand.hbm [shape: bf16[32,512], index: 1, kind: input, shape index: {}]
  %s2 = inlined_call_operand.hbm [shape: f32[1,512], index: 2, kind: input, shape index: {}]
  %s3 = inlined_call_operand.vmem [shape: f32[1,512], index: 3, kind: input, shape index: {}]
  %s4 = inlined_call_operand.hbm [shape: bf16[512,256], index: 4, kind: input, shape index: {}]
  %s5 = inlined_call_operand.vmem [shape: f32[1,256], index: 5, kind: input, shape index: {}]
  %s6 = inlined_call_operand.hbm [shape: bf16[16,256], index: 6, kind: output, shape index: {0}]
  %s7 = inlined_call_operand.hbm [shape: f32[8,256], index: 7, kind: output, shape index: {1}]
  %s8 = inlined_call_operand.hbm [shape: f32[8,256], index: 8, kind: output, shape index: {2}]
  %9 = xla_tuple %s6, %s7, %s8
  %s10 = sld [smem:[#allocation0]]
  $region66: #{tpu_custom_call.1} parent=0
    _
  %s12 = ssub.s32 1, %s10
  %s13 = scalar_select 0, %s12, %s10
  $region1: #{tpu_custom_call.1} parent=0
    #allocation2 [shape = 'u8[4096]{0}', space=vmem, size = 0x1000, scoped, tag = 'input window, operand 0, single buffered']
    #allocation3 [shape = 's32[1]{0}', space=sflag, size = 0x4, scoped, tag = 'scoped memory for tpu_custom_call.1']
    #allocation4 [shape = 's32[1]{0}', space=sflag, size = 0x4, scoped, tag = 'scoped memory for tpu_custom_call.1']
    #allocation5 [shape = 'u8[32768]{0}', space=vmem, size = 0x8000, scoped, tag = 'input window, operand 1, single buffered']
    #allocation6 [shape = 's32[1]{0}', space=sflag, size = 0x4, scoped, tag = 'scoped memory for tpu_custom_call.1']
    #allocation7 [shape = 'u8[2048]{0}', space=vmem, size = 0x800, scoped, tag = 'input window, operand 2, single buffered']
    #allocation8 [shape = 'u8[262144]{0}', space=vmem, size = 0x40000, scoped, tag = 'input window, operand 4, single buffered']
    #allocation9 [shape = 's32[1]{0}', space=sflag, size = 0x4, scoped, tag = 'scoped memory for tpu_custom_call.1']
    #allocation10 [shape = 'u8[8192]{0}', space=vmem, size = 0x2000, scoped, tag = 'output window, operand 0, single buffered']
    #allocation11 [shape = 'u8[8192]{0}', space=vmem, size = 0x2000, scoped, tag = 'output window, operand 1, single buffered']
    #allocation12 [shape = 's32[1]{0}', space=sflag, size = 0x4, scoped, tag = 'scoped memory for tpu_custom_call.1']
    #allocation13 [shape = 'u8[8192]{0}', space=vmem, size = 0x2000, scoped, tag = 'output window, operand 2, single buffered']
    %14 = vsyncpa [#allocation3], 0
    %15 = vsyncpa [#allocation6], 0
    %16 = vsyncpa [#allocation9], 0
    %17 = vsyncpa [#allocation4], 0
    %18 = vsyncpa [#allocation12], 0
    // Predicated region
    $region2: #{tpu_custom_call.1} parent=1 // pred_check
      _
    $region3: #{tpu_custom_call.1} parent=1 // pred_check_branch
      %20 = sbr.rel (0) target = $region5
    $region4: #{tpu_custom_call.1} parent=1 // pred_region
      %s22 = ssub.s32 128, 128
      %23 = vsyncadd [#allocation3], %s22
      %s24 = sshll.u32 [#allocation2], 4
      %s25 = int_to_ptr.vmem [resolvable:$true] %s24
      %30 = dma.hbm_to_vmem [thread:$0]  %s0, 128, %s25, [#allocation3], 64, 64, 4
    $region5: #{tpu_custom_call.1} parent=1 // pred_fallthru
      _
    // Predicated region
    $region6: #{tpu_custom_call.1} parent=1 // pred_check
      _
    $region7: #{tpu_custom_call.1} parent=1 // pred_check_branch
      %32 = sbr.rel (0) target = $region9
    $region8: #{tpu_custom_call.1} parent=1 // pred_region
      %s34 = ssub.s32 1024, 1024
      %35 = vsyncadd [#allocation6], %s34
      %s36 = sshll.u32 [#allocation5], 4
      %s37 = int_to_ptr.vmem [resolvable:$true] %s36
      %42 = dma.hbm_to_vmem [thread:$0]  %s1, 1024, %s37, [#allocation6], 256, 256, 16
    $region9: #{tpu_custom_call.1} parent=1 // pred_fallthru
      _
    // Predicated region
    $region10: #{tpu_custom_call.1} parent=1 // pred_check
      _
    $region11: #{tpu_custom_call.1} parent=1 // pred_check_branch
      %44 = sbr.rel (0) target = $region13
    $region12: #{tpu_custom_call.1} parent=1 // pred_region
      %s46 = ssub.s32 64, 64
      %47 = vsyncadd [#allocation6], %s46
      %s49 = sshll.u32 [#allocation7], 4
      %s50 = int_to_ptr.vmem [resolvable:$true] %s49
      %52 = dma.hbm_to_vmem [thread:$0]  %s2, 64, %s50, [#allocation6]
    $region13: #{tpu_custom_call.1} parent=1 // pred_fallthru
      _
    // Predicated region
    $region14: #{tpu_custom_call.1} parent=1 // pred_check
      _
    $region15: #{tpu_custom_call.1} parent=1 // pred_check_branch
      %54 = sbr.rel (0) target = $region17
    $region16: #{tpu_custom_call.1} parent=1 // pred_region
      _
    $region17: #{tpu_custom_call.1} parent=1 // pred_fallthru
      _
    // Predicated region
    $region18: #{tpu_custom_call.1} parent=1 // pred_check
      _
    $region19: #{tpu_custom_call.1} parent=1 // pred_check_branch
      %56 = sbr.rel (0) target = $region21
    $region20: #{tpu_custom_call.1} parent=1 // pred_region
      %s58 = ssub.s32 8192, 8192
      %59 = vsyncadd [#allocation9], %s58
      %s60 = sshll.u32 [#allocation8], 4
      %s61 = int_to_ptr.vmem [resolvable:$true] %s60
      %66 = dma.hbm_to_vmem [thread:$0]  %s4, 8192, %s61, [#allocation9], 128, 128, 8
    $region21: #{tpu_custom_call.1} parent=1 // pred_fallthru
      _
    // Predicated region
    $region22: #{tpu_custom_call.1} parent=1 // pred_check
      _
    $region23: #{tpu_custom_call.1} parent=1 // pred_check_branch
      %68 = sbr.rel (0) target = $region25
    $region24: #{tpu_custom_call.1} parent=1 // pred_region
      _
    $region25: #{tpu_custom_call.1} parent=1 // pred_fallthru
      _
    // Predicated region
    $region26: #{tpu_custom_call.1} parent=1 // pred_check
      _
    $region27: #{tpu_custom_call.1} parent=1 // pred_check_branch
      %70 = sbr.rel (0) target = $region29
    $region28: #{tpu_custom_call.1} parent=1 // pred_region
      %71 = dma.done [#allocation3], 128
    $region29: #{tpu_custom_call.1} parent=1 // pred_fallthru
      _
    // Predicated region
    $region30: #{tpu_custom_call.1} parent=1 // pred_check
      _
    $region31: #{tpu_custom_call.1} parent=1 // pred_check_branch
      %73 = sbr.rel (0) target = $region33
    $region32: #{tpu_custom_call.1} parent=1 // pred_region
      %74 = dma.done [#allocation6], 1024
    $region33: #{tpu_custom_call.1} parent=1 // pred_fallthru
      _
    // Predicated region
    $region34: #{tpu_custom_call.1} parent=1 // pred_check
      _
    $region35: #{tpu_custom_call.1} parent=1 // pred_check_branch
      %76 = sbr.rel (0) target = $region37
    $region36: #{tpu_custom_call.1} parent=1 // pred_region
      %77 = dma.done [#allocation6], 64
    $region37: #{tpu_custom_call.1} parent=1 // pred_fallthru
      _
    // Predicated region
    $region38: #{tpu_custom_call.1} parent=1 // pred_check
      _
    $region39: #{tpu_custom_call.1} parent=1 // pred_check_branch
      %79 = sbr.rel (0) target = $region41
    $region40: #{tpu_custom_call.1} parent=1 // pred_region
      %80 = dma.done [#allocation9], 8192
    $region41: #{tpu_custom_call.1} parent=1 // pred_fallthru
      _
    %v82 = vld [vmem:[#allocation2] sm:$0xf]
    %v83 = vld [vmem:[#allocation2 + $0x4] sm:$0xf]
    %v84 = vld [vmem:[#allocation5] sm:$0xff]
    %v85 = vld [vmem:[#allocation5 + $0x8] sm:$0xff]
    %v86 = vld [vmem:[#allocation5 + $0x10] sm:$0xff]
    %v87 = vld [vmem:[#allocation5 + $0x18] sm:$0xff]
    %v88 = vld [vmem:[#allocation5 + $0x20] sm:$0xff]
    %v89 = vld [vmem:[#allocation5 + $0x28] sm:$0xff]
    %v90 = vld [vmem:[#allocation5 + $0x30] sm:$0xff]
    %v91 = vld [vmem:[#allocation5 + $0x38] sm:$0xff]
    %v92 = vld [vmem:[#allocation7] sm:$0xf]
    %v94 = vlaneseq
    %v95 = vshrl.u32 %v94, 7
    %v96 = vsub.s32 0, %v95
    %v97 = vrot.slane %v92, %v96
    %v98 = vlaneseq
    %v99 = vshrl.u32 %v98, 7
    %v100 = vsub.s32 1, %v99
    %v101 = vrot.slane %v92, %v100
    %v102 = vlaneseq
    %v103 = vshrl.u32 %v102, 7
    %v104 = vsub.s32 2, %v103
    %v105 = vrot.slane %v92, %v104
    %v106 = vlaneseq
    %v107 = vshrl.u32 %v106, 7
    %v108 = vsub.s32 3, %v107
    %v109 = vrot.slane %v92, %v108
    %v116 = vunpack.c.l.b16 %v82
    %v117 = vunpack.c.l.b16 %v83
    %v118 = vpack.c.b16 %v117, %v116
    %v127 = vunpack.c.l.b16 %v84
    %v128 = vunpack.c.h.b16 %v84
    %v129 = vunpack.c.l.b16 %v85
    %v130 = vunpack.c.h.b16 %v85
    %v131 = vunpack.c.l.b16 %v86
    %v132 = vunpack.c.h.b16 %v86
    %v133 = vunpack.c.l.b16 %v87
    %v134 = vunpack.c.h.b16 %v87
    %v135 = vunpack.c.l.b16 %v88
    %v136 = vunpack.c.h.b16 %v88
    %v137 = vunpack.c.l.b16 %v89
    %v138 = vunpack.c.h.b16 %v89
    %v139 = vunpack.c.l.b16 %v90
    %v140 = vunpack.c.h.b16 %v90
    %v141 = vunpack.c.l.b16 %v91
    %v142 = vunpack.c.h.b16 %v91
    %v143 = vpack.c.b16 %v131, %v127
    %v144 = vpack.c.b16 %v132, %v128
    %v145 = vpack.c.b16 %v133, %v129
    %v146 = vpack.c.b16 %v134, %v130
    %v147 = vpack.c.b16 %v139, %v135
    %v148 = vpack.c.b16 %v140, %v136
    %v149 = vpack.c.b16 %v141, %v137
    %v150 = vpack.c.b16 %v142, %v138
    %vm159 = vcmask 261120
    %v161 = vsel %vm159, %v118, 0
    %163 = vmatprep.subr.bf16.mxu0 0
    %164 = vmatpush1.bf16.msra.mxu0 0
    %165 = vmatprep.subr.bf16.mxu0 0
    %166 = vmatpush1.bf16.msra.mxu0 0
    %167 = vmatprep.subr.bf16.mxu0 0
    %168 = vmatpush1.bf16.msra.mxu0 0
    %169 = vmatprep.subr.bf16.mxu0 0
    %170 = vmatpush1.bf16.msra.mxu0 0
    %171 = vmatprep.subr.bf16.mxu0 0
    %172 = vmatpush1.bf16.msra.mxu0 0
    %173 = vmatprep.subr.bf16.mxu0 0
    %174 = vmatpush1.bf16.msra.mxu0 0
    %175 = vmatprep.subr.bf16.mxu0 %v148
    %176 = vmatpush1.bf16.msra.mxu0 %v147
    %177 = vmatprep.subr.bf16.mxu0 %v144
    %178 = vmatpush1.bf16.msra.mxu0 %v143
    %179 = vmatprep.subr.bf16.mxu0 0
    %180 = vmatpush2.bf16.msra.mxu0 0
    %181 = vmatprep.subr.bf16.mxu0 0
    %182 = vmatpush2.bf16.msra.mxu0 0
    %183 = vmatprep.subr.bf16.mxu0 0
    %184 = vmatpush2.bf16.msra.mxu0 0
    %185 = vmatprep.subr.bf16.mxu0 0
    %186 = vmatpush2.bf16.msra.mxu0 0
    %187 = vmatprep.subr.bf16.mxu0 0
    %188 = vmatpush2.bf16.msra.mxu0 0
    %189 = vmatprep.subr.bf16.mxu0 0
    %190 = vmatpush2.bf16.msra.mxu0 0
    %191 = vmatprep.subr.bf16.mxu0 0
    %192 = vmatpush2.bf16.msra.mxu0 0
    %193 = vmatprep.subr.bf16.mxu0 0
    %194 = vmatpush2.bf16.msra.mxu0 0
    %195 = vmatprep.mubr.bf16.mxu0 0
    %196 = vmatmul.mubr.bf16.gmra.mxu0 %v161
    %v197 = vpop.f32.mrf.mxu0
    %v198 = vadd.f32 %v97, %v197
    %v199 = vpop.f32.mrf.mxu0
    %v200 = vadd.f32 %v101, %v199
    %v201 = vpop.f32.mrf.mxu0
    %v202 = vadd.f32 %v97, %v201
    %v203 = vpop.f32.mrf.mxu0
    %v204 = vadd.f32 %v101, %v203
    %205 = vdwg.mxu0
    %206 = vmatprep.subr.bf16.mxu0 0
    %207 = vmatpush1.bf16.msra.mxu0 0
    %208 = vmatprep.subr.bf16.mxu0 0
    %209 = vmatpush1.bf16.msra.mxu0 0
    %210 = vmatprep.subr.bf16.mxu0 0
    %211 = vmatpush1.bf16.msra.mxu0 0
    %212 = vmatprep.subr.bf16.mxu0 0
    %213 = vmatpush1.bf16.msra.mxu0 0
    %214 = vmatprep.subr.bf16.mxu0 0
    %215 = vmatpush1.bf16.msra.mxu0 0
    %216 = vmatprep.subr.bf16.mxu0 0
    %217 = vmatpush1.bf16.msra.mxu0 0
    %218 = vmatprep.subr.bf16.mxu0 %v150
    %219 = vmatpush1.bf16.msra.mxu0 %v149
    %220 = vmatprep.subr.bf16.mxu0 %v146
    %221 = vmatpush1.bf16.msra.mxu0 %v145
    %222 = vmatprep.subr.bf16.mxu0 0
    %223 = vmatpush2.bf16.msra.mxu0 0
    %224 = vmatprep.subr.bf16.mxu0 0
    %225 = vmatpush2.bf16.msra.mxu0 0
    %226 = vmatprep.subr.bf16.mxu0 0
    %227 = vmatpush2.bf16.msra.mxu0 0
    %228 = vmatprep.subr.bf16.mxu0 0
    %229 = vmatpush2.bf16.msra.mxu0 0
    %230 = vmatprep.subr.bf16.mxu0 0
    %231 = vmatpush2.bf16.msra.mxu0 0
    %232 = vmatprep.subr.bf16.mxu0 0
    %233 = vmatpush2.bf16.msra.mxu0 0
    %234 = vmatprep.subr.bf16.mxu0 0
    %235 = vmatpush2.bf16.msra.mxu0 0
    %236 = vmatprep.subr.bf16.mxu0 0
    %237 = vmatpush2.bf16.msra.mxu0 0
    %238 = vmatprep.mubr.bf16.mxu0 0
    %239 = vmatmul.mubr.bf16.gmra.mxu0 %v161
    %v240 = vpop.f32.mrf.mxu0
    %v241 = vadd.f32 %v105, %v240
    %v242 = vpop.f32.mrf.mxu0
    %v243 = vadd.f32 %v109, %v242
    %v244 = vpop.f32.mrf.mxu0
    %v245 = vadd.f32 %v105, %v244
    %v246 = vpop.f32.mrf.mxu0
    %v247 = vadd.f32 %v109, %v246
    %248 = vdwg.mxu0
    %v249 = vmax.f32 %v198, 0.0
    %v250 = vmax.f32 %v200, 0.0
    %v251 = vmax.f32 %v241, 0.0
    %v252 = vmax.f32 %v243, 0.0
    %v253 = vmax.f32 %v202, 0.0
    %v254 = vmax.f32 %v204, 0.0
    %v255 = vmax.f32 %v245, 0.0
    %v256 = vmax.f32 %v247, 0.0
    %v257 = vld [vmem:[%s3] sm:$0xf]
    %v259 = vlaneseq
    %v260 = vshrl.u32 %v259, 7
    %v261 = vsub.s32 0, %v260
    %v262 = vrot.slane %v257, %v261
    %v263 = vlaneseq
    %v264 = vshrl.u32 %v263, 7
    %v265 = vsub.s32 1, %v264
    %v266 = vrot.slane %v257, %v265
    %v267 = vlaneseq
    %v268 = vshrl.u32 %v267, 7
    %v269 = vsub.s32 2, %v268
    %v270 = vrot.slane %v257, %v269
    %v271 = vlaneseq
    %v272 = vshrl.u32 %v271, 7
    %v273 = vsub.s32 3, %v272
    %v274 = vrot.slane %v257, %v273
    %v279 = vmin.f32 %v249, %v262
    %v280 = vmin.f32 %v250, %v266
    %v281 = vmin.f32 %v251, %v270
    %v282 = vmin.f32 %v252, %v274
    %v283 = vmin.f32 %v253, %v262
    %v284 = vmin.f32 %v254, %v266
    %v285 = vmin.f32 %v255, %v270
    %v286 = vmin.f32 %v256, %v274
    %v287 = vpack.c.bf16 %v283, %v279
    %v288 = vpack.c.bf16 %v284, %v280
    %v289 = vpack.c.bf16 %v285, %v281
    %v290 = vpack.c.bf16 %v286, %v282
    %v291 = vld [vmem:[#allocation8] sm:$0xff]
    %v292 = vld [vmem:[#allocation8 + $0x8] sm:$0xff]
    %v293 = vld [vmem:[#allocation8 + $0x10] sm:$0xff]
    %v294 = vld [vmem:[#allocation8 + $0x18] sm:$0xff]
    %v295 = vld [vmem:[#allocation8 + $0x20] sm:$0xff]
    %v296 = vld [vmem:[#allocation8 + $0x28] sm:$0xff]
    %v297 = vld [vmem:[#allocation8 + $0x30] sm:$0xff]
    %v298 = vld [vmem:[#allocation8 + $0x38] sm:$0xff]
    %v299 = vld [vmem:[#allocation8 + $0x40] sm:$0xff]
    %v300 = vld [vmem:[#allocation8 + $0x48] sm:$0xff]
    %v301 = vld [vmem:[#allocation8 + $0x50] sm:$0xff]
    %v302 = vld [vmem:[#allocation8 + $0x58] sm:$0xff]
    %v303 = vld [vmem:[#allocation8 + $0x60] sm:$0xff]
    %v304 = vld [vmem:[#allocation8 + $0x68] sm:$0xff]
    %v305 = vld [vmem:[#allocation8 + $0x70] sm:$0xff]
    %v306 = vld [vmem:[#allocation8 + $0x78] sm:$0xff]
    %v307 = vld [vmem:[#allocation8 + $0x80] sm:$0xff]
    %v308 = vld [vmem:[#allocation8 + $0x88] sm:$0xff]
    %v309 = vld [vmem:[#allocation8 + $0x90] sm:$0xff]
    %v310 = vld [vmem:[#allocation8 + $0x98] sm:$0xff]
    %v311 = vld [vmem:[#allocation8 + $0xa0] sm:$0xff]
    %v312 = vld [vmem:[#allocation8 + $0xa8] sm:$0xff]
    %v313 = vld [vmem:[#allocation8 + $0xb0] sm:$0xff]
    %v314 = vld [vmem:[#allocation8 + $0xb8] sm:$0xff]
    %v315 = vld [vmem:[#allocation8 + $0xc0] sm:$0xff]
    %v316 = vld [vmem:[#allocation8 + $0xc8] sm:$0xff]
    %v317 = vld [vmem:[#allocation8 + $0xd0] sm:$0xff]
    %v318 = vld [vmem:[#allocation8 + $0xd8] sm:$0xff]
    %v319 = vld [vmem:[#allocation8 + $0xe0] sm:$0xff]
    %v320 = vld [vmem:[#allocation8 + $0xe8] sm:$0xff]
    %v321 = vld [vmem:[#allocation8 + $0xf0] sm:$0xff]
    %v322 = vld [vmem:[#allocation8 + $0xf8] sm:$0xff]
    %v323 = vld [vmem:[#allocation8 + $0x100] sm:$0xff]
    %v324 = vld [vmem:[#allocation8 + $0x108] sm:$0xff]
    %v325 = vld [vmem:[#allocation8 + $0x110] sm:$0xff]
    %v326 = vld [vmem:[#allocation8 + $0x118] sm:$0xff]
    %v327 = vld [vmem:[#allocation8 + $0x120] sm:$0xff]
    %v328 = vld [vmem:[#allocation8 + $0x128] sm:$0xff]
    %v329 = vld [vmem:[#allocation8 + $0x130] sm:$0xff]
    %v330 = vld [vmem:[#allocation8 + $0x138] sm:$0xff]
    %v331 = vld [vmem:[#allocation8 + $0x140] sm:$0xff]
    %v332 = vld [vmem:[#allocation8 + $0x148] sm:$0xff]
    %v333 = vld [vmem:[#allocation8 + $0x150] sm:$0xff]
    %v334 = vld [vmem:[#allocation8 + $0x158] sm:$0xff]
    %v335 = vld [vmem:[#allocation8 + $0x160] sm:$0xff]
    %v336 = vld [vmem:[#allocation8 + $0x168] sm:$0xff]
    %v337 = vld [vmem:[#allocation8 + $0x170] sm:$0xff]
    %v338 = vld [vmem:[#allocation8 + $0x178] sm:$0xff]
    %v339 = vld [vmem:[#allocation8 + $0x180] sm:$0xff]
    %v340 = vld [vmem:[#allocation8 + $0x188] sm:$0xff]
    %v341 = vld [vmem:[#allocation8 + $0x190] sm:$0xff]
    %v342 = vld [vmem:[#allocation8 + $0x198] sm:$0xff]
    %v343 = vld [vmem:[#allocation8 + $0x1a0] sm:$0xff]
    %v344 = vld [vmem:[#allocation8 + $0x1a8] sm:$0xff]
    %v345 = vld [vmem:[#allocation8 + $0x1b0] sm:$0xff]
    %v346 = vld [vmem:[#allocation8 + $0x1b8] sm:$0xff]
    %v347 = vld [vmem:[#allocation8 + $0x1c0] sm:$0xff]
    %v348 = vld [vmem:[#allocation8 + $0x1c8] sm:$0xff]
    %v349 = vld [vmem:[#allocation8 + $0x1d0] sm:$0xff]
    %v350 = vld [vmem:[#allocation8 + $0x1d8] sm:$0xff]
    %v351 = vld [vmem:[#allocation8 + $0x1e0] sm:$0xff]
    %v352 = vld [vmem:[#allocation8 + $0x1e8] sm:$0xff]
    %v353 = vld [vmem:[#allocation8 + $0x1f0] sm:$0xff]
    %v354 = vld [vmem:[#allocation8 + $0x1f8] sm:$0xff]
    %v355 = vld [vmem:[%s5] sm:$0x3]
    %v357 = vlaneseq
    %v358 = vshrl.u32 %v357, 7
    %v359 = vsub.s32 0, %v358
    %v360 = vrot.slane %v355, %v359
    %v361 = vlaneseq
    %v362 = vshrl.u32 %v361, 7
    %v363 = vsub.s32 1, %v362
    %v364 = vrot.slane %v355, %v363
    %v431 = vunpack.c.l.b16 %v291
    %v432 = vunpack.c.h.b16 %v291
    %v433 = vunpack.c.l.b16 %v292
    %v434 = vunpack.c.h.b16 %v292
    %v435 = vunpack.c.l.b16 %v293
    %v436 = vunpack.c.h.b16 %v293
    %v437 = vunpack.c.l.b16 %v294
    %v438 = vunpack.c.h.b16 %v294
    %v439 = vunpack.c.l.b16 %v295
    %v440 = vunpack.c.h.b16 %v295
    %v441 = vunpack.c.l.b16 %v296
    %v442 = vunpack.c.h.b16 %v296
    %v443 = vunpack.c.l.b16 %v297
    %v444 = vunpack.c.h.b16 %v297
    %v445 = vunpack.c.l.b16 %v298
    %v446 = vunpack.c.h.b16 %v298
    %v447 = vunpack.c.l.b16 %v299
    %v448 = vunpack.c.h.b16 %v299
    %v449 = vunpack.c.l.b16 %v300
    %v450 = vunpack.c.h.b16 %v300
    %v451 = vunpack.c.l.b16 %v301
    %v452 = vunpack.c.h.b16 %v301
    %v453 = vunpack.c.l.b16 %v302
    %v454 = vunpack.c.h.b16 %v302
    %v455 = vunpack.c.l.b16 %v303
    %v456 = vunpack.c.h.b16 %v303
    %v457 = vunpack.c.l.b16 %v304
    %v458 = vunpack.c.h.b16 %v304
    %v459 = vunpack.c.l.b16 %v305
    %v460 = vunpack.c.h.b16 %v305
    %v461 = vunpack.c.l.b16 %v306
    %v462 = vunpack.c.h.b16 %v306
    %v463 = vunpack.c.l.b16 %v307
    %v464 = vunpack.c.h.b16 %v307
    %v465 = vunpack.c.l.b16 %v308
    %v466 = vunpack.c.h.b16 %v308
    %v467 = vunpack.c.l.b16 %v309
    %v468 = vunpack.c.h.b16 %v309
    %v469 = vunpack.c.l.b16 %v310
    %v470 = vunpack.c.h.b16 %v310
    %v471 = vunpack.c.l.b16 %v311
    %v472 = vunpack.c.h.b16 %v311
    %v473 = vunpack.c.l.b16 %v312
    %v474 = vunpack.c.h.b16 %v312
    %v475 = vunpack.c.l.b16 %v313
    %v476 = vunpack.c.h.b16 %v313
    %v477 = vunpack.c.l.b16 %v314
    %v478 = vunpack.c.h.b16 %v314
    %v479 = vunpack.c.l.b16 %v315
    %v480 = vunpack.c.h.b16 %v315
    %v481 = vunpack.c.l.b16 %v316
    %v482 = vunpack.c.h.b16 %v316
    %v483 = vunpack.c.l.b16 %v317
    %v484 = vunpack.c.h.b16 %v317
    %v485 = vunpack.c.l.b16 %v318
    %v486 = vunpack.c.h.b16 %v318
    %v487 = vunpack.c.l.b16 %v319
    %v488 = vunpack.c.h.b16 %v319
    %v489 = vunpack.c.l.b16 %v320
    %v490 = vunpack.c.h.b16 %v320
    %v491 = vunpack.c.l.b16 %v321
    %v492 = vunpack.c.h.b16 %v321
    %v493 = vunpack.c.l.b16 %v322
    %v494 = vunpack.c.h.b16 %v322
    %v495 = vunpack.c.l.b16 %v323
    %v496 = vunpack.c.h.b16 %v323
    %v497 = vunpack.c.l.b16 %v324
    %v498 = vunpack.c.h.b16 %v324
    %v499 = vunpack.c.l.b16 %v325
    %v500 = vunpack.c.h.b16 %v325
    %v501 = vunpack.c.l.b16 %v326
    %v502 = vunpack.c.h.b16 %v326
    %v503 = vunpack.c.l.b16 %v327
    %v504 = vunpack.c.h.b16 %v327
    %v505 = vunpack.c.l.b16 %v328
    %v506 = vunpack.c.h.b16 %v328
    %v507 = vunpack.c.l.b16 %v329
    %v508 = vunpack.c.h.b16 %v329
    %v509 = vunpack.c.l.b16 %v330
    %v510 = vunpack.c.h.b16 %v330
    %v511 = vunpack.c.l.b16 %v331
    %v512 = vunpack.c.h.b16 %v331
    %v513 = vunpack.c.l.b16 %v332
    %v514 = vunpack.c.h.b16 %v332
    %v515 = vunpack.c.l.b16 %v333
    %v516 = vunpack.c.h.b16 %v333
    %v517 = vunpack.c.l.b16 %v334
    %v518 = vunpack.c.h.b16 %v334
    %v519 = vunpack.c.l.b16 %v335
    %v520 = vunpack.c.h.b16 %v335
    %v521 = vunpack.c.l.b16 %v336
    %v522 = vunpack.c.h.b16 %v336
    %v523 = vunpack.c.l.b16 %v337
    %v524 = vunpack.c.h.b16 %v337
    %v525 = vunpack.c.l.b16 %v338
    %v526 = vunpack.c.h.b16 %v338
    %v527 = vunpack.c.l.b16 %v339
    %v528 = vunpack.c.h.b16 %v339
    %v529 = vunpack.c.l.b16 %v340
    %v530 = vunpack.c.h.b16 %v340
    %v531 = vunpack.c.l.b16 %v341
    %v532 = vunpack.c.h.b16 %v341
    %v533 = vunpack.c.l.b16 %v342
    %v534 = vunpack.c.h.b16 %v342
    %v535 = vunpack.c.l.b16 %v343
    %v536 = vunpack.c.h.b16 %v343
    %v537 = vunpack.c.l.b16 %v344
    %v538 = vunpack.c.h.b16 %v344
    %v539 = vunpack.c.l.b16 %v345
    %v540 = vunpack.c.h.b16 %v345
    %v541 = vunpack.c.l.b16 %v346
    %v542 = vunpack.c.h.b16 %v346
    %v543 = vunpack.c.l.b16 %v347
    %v544 = vunpack.c.h.b16 %v347
    %v545 = vunpack.c.l.b16 %v348
    %v546 = vunpack.c.h.b16 %v348
    %v547 = vunpack.c.l.b16 %v349
    %v548 = vunpack.c.h.b16 %v349
    %v549 = vunpack.c.l.b16 %v350
    %v550 = vunpack.c.h.b16 %v350
    %v551 = vunpack.c.l.b16 %v351
    %v552 = vunpack.c.h.b16 %v351
    %v553 = vunpack.c.l.b16 %v352
    %v554 = vunpack.c.h.b16 %v352
    %v555 = vunpack.c.l.b16 %v353
    %v556 = vunpack.c.h.b16 %v353
    %v557 = vunpack.c.l.b16 %v354
    %v558 = vunpack.c.h.b16 %v354
    %v559 = vpack.c.b16 %v433, %v431
    %v560 = vpack.c.b16 %v434, %v432
    %v561 = vpack.c.b16 %v437, %v435
    %v562 = vpack.c.b16 %v438, %v436
    %v563 = vpack.c.b16 %v441, %v439
    %v564 = vpack.c.b16 %v442, %v440
    %v565 = vpack.c.b16 %v445, %v443
    %v566 = vpack.c.b16 %v446, %v444
    %v567 = vpack.c.b16 %v449, %v447
    %v568 = vpack.c.b16 %v450, %v448
    %v569 = vpack.c.b16 %v453, %v451
    %v570 = vpack.c.b16 %v454, %v452
    %v571 = vpack.c.b16 %v457, %v455
    %v572 = vpack.c.b16 %v458, %v456
    %v573 = vpack.c.b16 %v461, %v459
    %v574 = vpack.c.b16 %v462, %v460
    %v575 = vpack.c.b16 %v465, %v463
    %v576 = vpack.c.b16 %v466, %v464
    %v577 = vpack.c.b16 %v469, %v467
    %v578 = vpack.c.b16 %v470, %v468
    %v579 = vpack.c.b16 %v473, %v471
    %v580 = vpack.c.b16 %v474, %v472
    %v581 = vpack.c.b16 %v477, %v475
    %v582 = vpack.c.b16 %v478, %v476
    %v583 = vpack.c.b16 %v481, %v479
    %v584 = vpack.c.b16 %v482, %v480
    %v585 = vpack.c.b16 %v485, %v483
    %v586 = vpack.c.b16 %v486, %v484
    %v587 = vpack.c.b16 %v489, %v487
    %v588 = vpack.c.b16 %v490, %v488
    %v589 = vpack.c.b16 %v493, %v491
    %v590 = vpack.c.b16 %v494, %v492
    %v591 = vpack.c.b16 %v497, %v495
    %v592 = vpack.c.b16 %v498, %v496
    %v593 = vpack.c.b16 %v501, %v499
    %v594 = vpack.c.b16 %v502, %v500
    %v595 = vpack.c.b16 %v505, %v503
    %v596 = vpack.c.b16 %v506, %v504
    %v597 = vpack.c.b16 %v509, %v507
    %v598 = vpack.c.b16 %v510, %v508
    %v599 = vpack.c.b16 %v513, %v511
    %v600 = vpack.c.b16 %v514, %v512
    %v601 = vpack.c.b16 %v517, %v515
    %v602 = vpack.c.b16 %v518, %v516
    %v603 = vpack.c.b16 %v521, %v519
    %v604 = vpack.c.b16 %v522, %v520
    %v605 = vpack.c.b16 %v525, %v523
    %v606 = vpack.c.b16 %v526, %v524
    %v607 = vpack.c.b16 %v529, %v527
    %v608 = vpack.c.b16 %v530, %v528
    %v609 = vpack.c.b16 %v533, %v531
    %v610 = vpack.c.b16 %v534, %v532
    %v611 = vpack.c.b16 %v537, %v535
    %v612 = vpack.c.b16 %v538, %v536
    %v613 = vpack.c.b16 %v541, %v539
    %v614 = vpack.c.b16 %v542, %v540
    %v615 = vpack.c.b16 %v545, %v543
    %v616 = vpack.c.b16 %v546, %v544
    %v617 = vpack.c.b16 %v549, %v547
    %v618 = vpack.c.b16 %v550, %v548
    %v619 = vpack.c.b16 %v553, %v551
    %v620 = vpack.c.b16 %v554, %v552
    %v621 = vpack.c.b16 %v557, %v555
    %v622 = vpack.c.b16 %v558, %v556
    %687 = vmatprep.subr.bf16.mxu0 %v574
    %688 = vmatpush1.bf16.msra.mxu0 %v573
    %689 = vmatprep.subr.bf16.mxu0 %v572
    %690 = vmatpush1.bf16.msra.mxu0 %v571
    %691 = vmatprep.subr.bf16.mxu0 %v570
    %692 = vmatpush1.bf16.msra.mxu0 %v569
    %693 = vmatprep.subr.bf16.mxu0 %v568
    %694 = vmatpush1.bf16.msra.mxu0 %v567
    %695 = vmatprep.subr.bf16.mxu0 %v566
    %696 = vmatpush1.bf16.msra.mxu0 %v565
    %697 = vmatprep.subr.bf16.mxu0 %v564
    %698 = vmatpush1.bf16.msra.mxu0 %v563
    %699 = vmatprep.subr.bf16.mxu0 %v562
    %700 = vmatpush1.bf16.msra.mxu0 %v561
    %701 = vmatprep.subr.bf16.mxu0 %v560
    %702 = vmatpush1.bf16.msra.mxu0 %v559
    %703 = vmatprep.subr.bf16.mxu0 %v590
    %704 = vmatpush2.bf16.msra.mxu0 %v589
    %705 = vmatprep.subr.bf16.mxu0 %v588
    %706 = vmatpush2.bf16.msra.mxu0 %v587
    %707 = vmatprep.subr.bf16.mxu0 %v586
    %708 = vmatpush2.bf16.msra.mxu0 %v585
    %709 = vmatprep.subr.bf16.mxu0 %v584
    %710 = vmatpush2.bf16.msra.mxu0 %v583
    %711 = vmatprep.subr.bf16.mxu0 %v582
    %712 = vmatpush2.bf16.msra.mxu0 %v581
    %713 = vmatprep.subr.bf16.mxu0 %v580
    %714 = vmatpush2.bf16.msra.mxu0 %v579
    %715 = vmatprep.subr.bf16.mxu0 %v578
    %716 = vmatpush2.bf16.msra.mxu0 %v577
    %717 = vmatprep.subr.bf16.mxu0 %v576
    %718 = vmatpush2.bf16.msra.mxu0 %v575
    %719 = vmatprep.mubr.bf16.mxu0 %v288
    %720 = vmatmul.mubr.bf16.gmra.mxu0 %v287
    %v721 = vpop.f32.mrf.mxu0
    %v722 = vadd.f32 %v360, %v721
    %v723 = vpop.f32.mrf.mxu0
    %v724 = vadd.f32 %v364, %v723
    %v725 = vpop.f32.mrf.mxu0
    %v726 = vadd.f32 %v360, %v725
    %v727 = vpop.f32.mrf.mxu0
    %v728 = vadd.f32 %v364, %v727
    %729 = vdwg.mxu0
    %730 = vmatprep.subr.bf16.mxu0 %v606
    %731 = vmatpush1.bf16.msra.mxu0 %v605
    %732 = vmatprep.subr.bf16.mxu0 %v604
    %733 = vmatpush1.bf16.msra.mxu0 %v603
    %734 = vmatprep.subr.bf16.mxu0 %v602
    %735 = vmatpush1.bf16.msra.mxu0 %v601
    %736 = vmatprep.subr.bf16.mxu0 %v600
    %737 = vmatpush1.bf16.msra.mxu0 %v599
    %738 = vmatprep.subr.bf16.mxu0 %v598
    %739 = vmatpush1.bf16.msra.mxu0 %v597
    %740 = vmatprep.subr.bf16.mxu0 %v596
    %741 = vmatpush1.bf16.msra.mxu0 %v595
    %742 = vmatprep.subr.bf16.mxu0 %v594
    %743 = vmatpush1.bf16.msra.mxu0 %v593
    %744 = vmatprep.subr.bf16.mxu0 %v592
    %745 = vmatpush1.bf16.msra.mxu0 %v591
    %746 = vmatprep.subr.bf16.mxu0 %v622
    %747 = vmatpush2.bf16.msra.mxu0 %v621
    %748 = vmatprep.subr.bf16.mxu0 %v620
    %749 = vmatpush2.bf16.msra.mxu0 %v619
    %750 = vmatprep.subr.bf16.mxu0 %v618
    %751 = vmatpush2.bf16.msra.mxu0 %v617
    %752 = vmatprep.subr.bf16.mxu0 %v616
    %753 = vmatpush2.bf16.msra.mxu0 %v615
    %754 = vmatprep.subr.bf16.mxu0 %v614
    %755 = vmatpush2.bf16.msra.mxu0 %v613
    %756 = vmatprep.subr.bf16.mxu0 %v612
    %757 = vmatpush2.bf16.msra.mxu0 %v611
    %758 = vmatprep.subr.bf16.mxu0 %v610
    %759 = vmatpush2.bf16.msra.mxu0 %v609
    %760 = vmatprep.subr.bf16.mxu0 %v608
    %761 = vmatpush2.bf16.msra.mxu0 %v607
    %762 = vmatprep.mubr.bf16.mxu0 %v290
    %763 = vmatmul.mubr.bf16.gmra.mxu0 %v289
    %v764 = vpop.f32.mrf.mxu0
    %v765 = vadd.f32 %v722, %v764
    %v766 = vpop.f32.mrf.mxu0
    %v767 = vadd.f32 %v724, %v766
    %v768 = vpop.f32.mrf.mxu0
    %v769 = vadd.f32 %v726, %v768
    %v770 = vpop.f32.mrf.mxu0
    %v771 = vadd.f32 %v728, %v770
    %772 = vdwg.mxu0
    %v773 = vpack.c.bf16 %v769, %v765
    %v774 = vpack.c.bf16 %v771, %v767
    %v777 = vunpack.c.l.b16 %v773
    %v778 = vunpack.c.l.b16 %v774
    %v779 = vunpack.c.h.b16 %v773
    %v780 = vunpack.c.h.b16 %v774
    %v781 = vpack.c.b16 %v778, %v777
    %v782 = vpack.c.b16 %v780, %v779
    %785 = vst [vmem:[#allocation10] sm:$0xff] %v781
    %786 = vst [vmem:[#allocation10 + $0x8] sm:$0xff] %v782
    %v787 = vlaneseq
    %v788 = vshrl.u32 %v787, 7
    %v789 = vadd.s32 %v788, 8
    %s790 = smul.u32 0, 16
    %v791 = vstv %s790
    %v792 = vadd.s32 %v788, %v791
    %v793 = vadd.s32 %v789, %v791
    %vm794 = vcmp.lt.s32.totalorder %v792, 16
    %vm795 = vcmp.lt.s32.totalorder %v793, 16
    %v796 = vsel %vm794, 1, 0
    %v797 = vsel %vm795, 1, 0
    %v798 = vcvt.s32.f32 %v796
    %v799 = vcvt.s32.f32 %v797
    %v800 = vmul.f32 %v765, %v798
    %v801 = vmul.f32 %v767, %v798
    %v802 = vmul.f32 %v769, %v799
    %v803 = vmul.f32 %v771, %v799
    %v804 = vadd.f32 %v800, %v802
    %v805 = vrot.slane %v804, 4
    %v806 = vadd.f32 %v804, %v805
    %v807 = vrot.slane %v806, 2
    %v808 = vadd.f32 %v806, %v807
    %v809 = vrot.slane %v808, 1
    %v810 = vadd.f32 %v808, %v809
    %v811 = vadd.f32 %v801, %v803
    %v812 = vrot.slane %v811, 4
    %v813 = vadd.f32 %v811, %v812
    %v814 = vrot.slane %v813, 2
    %v815 = vadd.f32 %v813, %v814
    %v816 = vrot.slane %v815, 1
    %v817 = vadd.f32 %v815, %v816
    %818 = vst [vmem:[#allocation11] sm:$0xff] %v810
    %819 = vst [vmem:[#allocation11 + $0x8] sm:$0xff] %v817
    %v820 = vmul.f32 %v800, %v800
    %v821 = vmul.f32 %v801, %v801
    %v822 = vmul.f32 %v802, %v802
    %v823 = vmul.f32 %v803, %v803
    %v824 = vadd.f32 %v820, %v822
    %v825 = vrot.slane %v824, 4
    %v826 = vadd.f32 %v824, %v825
    %v827 = vrot.slane %v826, 2
    %v828 = vadd.f32 %v826, %v827
    %v829 = vrot.slane %v828, 1
    %v830 = vadd.f32 %v828, %v829
    %v831 = vadd.f32 %v821, %v823
    %v832 = vrot.slane %v831, 4
    %v833 = vadd.f32 %v831, %v832
    %v834 = vrot.slane %v833, 2
    %v835 = vadd.f32 %v833, %v834
    %v836 = vrot.slane %v835, 1
    %v837 = vadd.f32 %v835, %v836
    %838 = vst [vmem:[#allocation13] sm:$0xff] %v830
    %839 = vst [vmem:[#allocation13 + $0x8] sm:$0xff] %v837
    // Predicated region
    $region42: #{tpu_custom_call.1} parent=1 // pred_check
      _
    $region43: #{tpu_custom_call.1} parent=1 // pred_check_branch
      %841 = sbr.rel (0) target = $region45
    $region44: #{tpu_custom_call.1} parent=1 // pred_region
      %s843 = ssub.s32 256, 256
      %844 = vsyncadd [#allocation4], %s843
      %s845 = sshll.u32 [#allocation10], 4
      %s846 = int_to_ptr.vmem [resolvable:$true] %s845
      %851 = dma.vmem_to_hbm [thread:$0]  %s846, 256, %s6, [#allocation4], 128, 128, 8
    $region45: #{tpu_custom_call.1} parent=1 // pred_fallthru
      _
    // Predicated region
    $region46: #{tpu_custom_call.1} parent=1 // pred_check
      _
    $region47: #{tpu_custom_call.1} parent=1 // pred_check_branch
      %853 = sbr.rel (0) target = $region49
    $region48: #{tpu_custom_call.1} parent=1 // pred_region
      %s855 = ssub.s32 256, 256
      %856 = vsyncadd [#allocation12], %s855
      %s858 = sshll.u32 [#allocation11], 4
      %s859 = int_to_ptr.vmem [resolvable:$true] %s858
      %861 = dma.vmem_to_hbm [thread:$0]  %s859, 256, %s7, [#allocation12]
    $region49: #{tpu_custom_call.1} parent=1 // pred_fallthru
      _
    // Predicated region
    $region50: #{tpu_custom_call.1} parent=1 // pred_check
      _
    $region51: #{tpu_custom_call.1} parent=1 // pred_check_branch
      %863 = sbr.rel (0) target = $region53
    $region52: #{tpu_custom_call.1} parent=1 // pred_region
      %s865 = ssub.s32 256, 256
      %866 = vsyncadd [#allocation12], %s865
      %s868 = sshll.u32 [#allocation13], 4
      %s869 = int_to_ptr.vmem [resolvable:$true] %s868
      %871 = dma.vmem_to_hbm [thread:$0]  %s869, 256, %s8, [#allocation12]
    $region53: #{tpu_custom_call.1} parent=1 // pred_fallthru
      _
    // Predicated region
    $region54: #{tpu_custom_call.1} parent=1 // pred_check
      _
    $region55: #{tpu_custom_call.1} parent=1 // pred_check_branch
      %873 = sbr.rel (0) target = $region57
    $region56: #{tpu_custom_call.1} parent=1 // pred_region
      %874 = dma.done [#allocation4], 256
    $region57: #{tpu_custom_call.1} parent=1 // pred_fallthru
      _
    // Predicated region
    $region58: #{tpu_custom_call.1} parent=1 // pred_check
      _
    $region59: #{tpu_custom_call.1} parent=1 // pred_check_branch
      %876 = sbr.rel (0) target = $region61
    $region60: #{tpu_custom_call.1} parent=1 // pred_region
      %877 = dma.done [#allocation12], 256
    $region61: #{tpu_custom_call.1} parent=1 // pred_fallthru
      _
    // Predicated region
    $region62: #{tpu_custom_call.1} parent=1 // pred_check
      _
    $region63: #{tpu_custom_call.1} parent=1 // pred_check_branch
      %879 = sbr.rel (0) target = $region65
    $region64: #{tpu_custom_call.1} parent=1 // pred_region
      %880 = dma.done [#allocation12], 256
    $region65: #{tpu_custom_call.1} parent=1 // pred_fallthru
      _
    %881 = vsyncpa [#allocation3], 1
    %882 = vsyncpa [#allocation6], 1
    %883 = vsyncpa [#allocation9], 1
    %884 = vsyncpa [#allocation4], 1
    %885 = vsyncpa [#allocation12], 1

</llo_original>
